<compile_context>
chip_gen: v6e
topology: v6e:2x2x1
jax: 0.10.0
libtpu: 0.0.40
codegen_flags: <defaults>
</compile_context>

<pallas_src>
import jax
import jax.numpy as jnp
from jax.experimental import pallas as pl
from jax.experimental.pallas import tpu as pltpu

_MiB = 1024 * 1024


def _round_up(x, m):
    return (x + m - 1) // m * m


def _vmem_capacity_bytes():
    """Per-core VMEM capacity; conservative (v7x, 64 MiB) fallback if query fails."""
    try:
        cap = int(getattr(pltpu.get_tpu_info(), "vmem_capacity_bytes", 0))
        if cap > 0:
            return cap
    except Exception:
        pass
    return 64 * _MiB


# -----------------------------------------------------------------------------
# Kernel bodies
# -----------------------------------------------------------------------------

def _streamed_kernel(x_ref, w1_ref, b1_ref, w2_ref, b2_ref, o_ref, acc_ref):
    """2-D grid (row tiles, hidden chunks); W1/W2 chunks streamed from HBM."""
    k = pl.program_id(1)

    @pl.when(k == 0)
    def _():
        acc_ref[...] = jnp.zeros_like(acc_ref)

    # First linear restricted to this hidden chunk: (tm, E) @ (E, tk) -> f32.
    h = jnp.dot(x_ref[...], w1_ref[...], preferred_element_type=jnp.float32)
    h = jnp.maximum(h + b1_ref[...], 0.0)  # bias + ReLU on the VPU, in f32.

    # Second linear: partial contraction over this chunk, accumulated into the
    # resident f32 scratch (output block index is constant across k).
    acc_ref[...] += jnp.dot(h.astype(w2_ref.dtype), w2_ref[...],
                            preferred_element_type=jnp.float32)

    @pl.when(k == pl.num_programs(1) - 1)
    def _():
        # Dropout: eval-mode identity.
        o_ref[...] = (acc_ref[...] + b2_ref[...]).astype(o_ref.dtype)


def _make_resident_kernel(n_chunks, tk):
    """1-D grid (row tiles); full W1/W2 live in VMEM (constant block indices ->
    DMA'd once for the whole grid). The hidden dim is walked with a statically
    unrolled loop so all ref slices are static (zero-cost views)."""

    def kernel(x_ref, w1_ref, b1_ref, w2_ref, b2_ref, o_ref, acc_ref):
        x = x_ref[...]
        for c in range(n_chunks):          # static unroll (n_chunks <= 16)
            lo = c * tk
            hi = lo + tk
            h = jnp.dot(x, w1_ref[:, lo:hi], preferred_element_type=jnp.float32)
            h = jnp.maximum(h + b1_ref[:, lo:hi], 0.0)
            part = jnp.dot(h.astype(w2_ref.dtype), w2_ref[lo:hi, :],
                           preferred_element_type=jnp.float32)
            if c == 0:
                acc_ref[...] = part
            else:
                acc_ref[...] += part
        # Dropout: eval-mode identity.
        o_ref[...] = (acc_ref[...] + b2_ref[...]).astype(o_ref.dtype)

    return kernel


# -----------------------------------------------------------------------------
# Wrapper
# -----------------------------------------------------------------------------

def feed_forward(x, w1, b1, w2, b2, *, tm=None, tk=None,
                 compute_dtype=jnp.bfloat16):
    """x: (B, T, n_embed) or (M, n_embed). Returns the same leading shape.

    compute_dtype feeds the MXU (accumulation is always f32). Default bf16;
    pass jnp.float32 for an exact f32 path.
    """
    orig_shape = x.shape
    out_dtype = x.dtype
    E = orig_shape[-1]
    H = w1.shape[1]

    # --- dtype / layout prep: cast first, then a single pad (one pass over x) ---
    x2 = x.reshape(-1, E).astype(compute_dtype)
    M = x2.shape[0]

    # Lane-dense feature dim: pad E up to a multiple of 128 so x / W2 / out blocks
    # use unmasked vector stores and fill the MXU N dimension.
    E_pad = _round_up(E, 128)

    ws = jnp.dtype(compute_dtype).itemsize
    os_ = jnp.dtype(out_dtype).itemsize

    # --- generation-aware VMEM budget (64 MiB/TC on v7x, 128 MiB on v5e/v6e) ---
    vmem_cap = _vmem_capacity_bytes()
    vmem_limit = min(vmem_cap - 8 * _MiB, 112 * _MiB)
    budget = vmem_limit - 16 * _MiB          # headroom for Mosaic internals / temps

    # --- hidden-chunk tile: lane-aligned divisor of H when possible ---
    if tk is None:
        tk = H
        for cand in (512, 256, 128):
            if H % cand == 0:
                tk = cand
                break
    assert H % tk == 0, "tk must divide the hidden dimension"
    n_chunks = H // tk

    # --- row tile: streamed weights are re-read once per row tile, so arithmetic
    # intensity on them is ~tm flops/byte; target above the HBM/MXU balance point
    # (~620-640 on v6e/v7x) when VMEM allows, while keeping >=2 tiles for megacore.
    if tm is None:
        tm = 1024 if vmem_cap >= 96 * _MiB else 768
        if M >= 512:
            tm = min(tm, max(256, _round_up(-(-M // 2), 256)))
    tm = max(8, _round_up(min(tm, _round_up(M, 8)), 8))

    # --- VMEM accounting (double-buffered inputs/outputs + acc scratch + h temps) ---
    def vmem_need(tm_, tk_, resident_):
        need = tm_ * E_pad * 4                 # f32 accumulator scratch
        need += 2 * tm_ * tk_ * 4              # live h-chunk temporaries
        need += 2 * tm_ * E_pad * ws           # x tile (double-buffered)
        need += 2 * tm_ * E_pad * os_          # out tile (double-buffered)
        need += 2 * (H + E_pad) * 4            # biases (f32)
        if resident_:
            need += 2 * 2 * E_pad * H * ws     # full W1 + W2 (2 buffers each)
        else:
            need += 2 * 2 * E_pad * tk_ * ws   # W1/W2 chunks (double-buffered)
        return need

    # Prefer the weight-resident path (weights DMA'd from HBM exactly once).
    resident = False
    if n_chunks <= 16:
        for tm_try in sorted({tm, min(tm, 512), min(tm, 256)}, reverse=True):
            tm_try = max(8, _round_up(tm_try, 8))
            if vmem_need(tm_try, tk, True) <= budget:
                tm, resident = tm_try, True
                break
    if not resident:
        # Shrink tiles until the streamed pipeline fits the budget.
        while vmem_need(tm, tk, False) > budget and tm > 256:
            tm = max(256, _round_up(tm // 2, 8))
        while vmem_need(tm, tk, False) > budget and tk >= 256 and tk % 256 == 0:
            tk //= 2
        n_chunks = H // tk

    # --- pad activations (rows to tm multiple, features to E_pad) in one pass ---
    M_pad = _round_up(M, tm)
    if M_pad != M or E_pad != E:
        x2 = jnp.pad(x2, ((0, M_pad - M), (0, E_pad - E)))

    w1c = w1.astype(compute_dtype)
    w2c = w2.astype(compute_dtype)
    b1f = b1.reshape(1, H).astype(jnp.float32)
    b2f = b2.reshape(1, E).astype(jnp.float32)
    if E_pad != E:
        w1c = jnp.pad(w1c, ((0, E_pad - E), (0, 0)))
        w2c = jnp.pad(w2c, ((0, 0), (0, E_pad - E)))
        b2f = jnp.pad(b2f, ((0, 0), (0, E_pad - E)))

    # --- cost estimate reflecting actual HBM traffic ---
    n_row_tiles = M_pad // tm
    w_bytes = (w1c.size + w2c.size) * ws
    bytes_accessed = int(
        M_pad * E_pad * ws
        + (w_bytes if resident else w_bytes * n_row_tiles)
        + (H + E_pad) * 4
        + M_pad * E_pad * os_)
    cost = pl.CostEstimate(flops=int(4 * M_pad * E_pad * H),
                           transcendentals=0,
                           bytes_accessed=bytes_accessed)

    if resident:
        grid = (n_row_tiles,)
        kernel = _make_resident_kernel(n_chunks, tk)
        in_specs = [
            pl.BlockSpec((tm, E_pad), lambda i: (i, 0)),    # x row tile
            pl.BlockSpec((E_pad, H), lambda i: (0, 0)),     # W1: VMEM-resident
            pl.BlockSpec((1, H), lambda i: (0, 0)),         # b1: resident
            pl.BlockSpec((H, E_pad), lambda i: (0, 0)),     # W2: VMEM-resident
            pl.BlockSpec((1, E_pad), lambda i: (0, 0)),     # b2
        ]
        out_spec = pl.BlockSpec((tm, E_pad), lambda i: (i, 0))
        dims = ("parallel",)
    else:
        grid = (n_row_tiles, H // tk)
        kernel = _streamed_kernel
        in_specs = [
            pl.BlockSpec((tm, E_pad), lambda i, k: (i, 0)),   # x: resident over k
            pl.BlockSpec((E_pad, tk), lambda i, k: (0, k)),   # W1 chunk (streamed)
            pl.BlockSpec((1, tk), lambda i, k: (0, k)),       # b1 chunk
            pl.BlockSpec((tk, E_pad), lambda i, k: (k, 0)),   # W2 chunk (streamed)
            pl.BlockSpec((1, E_pad), lambda i, k: (0, 0)),    # b2
        ]
        out_spec = pl.BlockSpec((tm, E_pad), lambda i, k: (i, 0))
        dims = ("parallel", "arbitrary")

    out = pl.pallas_call(
        kernel,
        out_shape=jax.ShapeDtypeStruct((M_pad, E_pad), out_dtype),
        grid_spec=pltpu.PrefetchScalarGridSpec(
            num_scalar_prefetch=0,
            grid=grid,
            in_specs=in_specs,
            out_specs=out_spec,
            scratch_shapes=[pltpu.VMEM((tm, E_pad), jnp.float32)],
        ),
        compiler_params=pltpu.CompilerParams(
            dimension_semantics=dims,
            vmem_limit_bytes=int(vmem_limit),
        ),
        cost_estimate=cost,
    )(x2, w1c, b1f, w2c, b2f)

    out = out[:M, :E]
    return out.reshape(orig_shape)


def init_params(key, n_embed, dtype=jnp.float32):
    """Deterministic init matching nn.Linear's U(-1/sqrt(fan_in), 1/sqrt(fan_in))."""
    hidden = 4 * n_embed
    k1, k2, k3, k4 = jax.random.split(key, 4)
    bound1 = 1.0 / jnp.sqrt(n_embed)
    bound2 = 1.0 / jnp.sqrt(hidden)
    # Stored as (in, out): equivalent to PyTorch weight.T
    w1 = jax.random.uniform(k1, (n_embed, hidden), dtype, -bound1, bound1)
    b1 = jax.random.uniform(k2, (1, hidden), dtype, -bound1, bound1)
    w2 = jax.random.uniform(k3, (hidden, n_embed), dtype, -bound2, bound2)
    b2 = jax.random.uniform(k4, (1, n_embed), dtype, -bound2, bound2)
    return w1, b1, w2, b2


if __name__ == "__main__":
    key = jax.random.PRNGKey(0)
    n_embed = 32
    dropout = 0.1            # inference-mode: no-op
    B, T = 2, 8              # x: (batch, seq, n_embed)

    kx, kp = jax.random.split(key)
    x = jax.random.normal(kx, (B, T, n_embed), jnp.float32)
    w1, b1, w2, b2 = init_params(kp, n_embed)

    # Pure-JAX f32 reference.
    ref = jnp.maximum(x.reshape(-1, n_embed) @ w1 + b1, 0.0) @ w2 + b2
    ref = ref.reshape(B, T, n_embed)

    # Exact f32-compute path: tight tolerance.
    y32 = feed_forward(x, w1, b1, w2, b2, compute_dtype=jnp.float32)
    y32 = jax.block_until_ready(y32)
    assert jnp.allclose(y32, ref, atol=1e-5, rtol=1e-5), "f32 path mismatch"

    # Default fast path (bf16 MXU operands, f32 accumulation): bf16 tolerance.
    y = feed_forward(x, w1, b1, w2, b2)
    y = jax.block_until_ready(y)
    assert jnp.allclose(y, ref, atol=2e-2, rtol=2e-2), "bf16 path mismatch"

    print("KERNEL_OK")
</pallas_src>

<mosaic_0001>
module attributes {stable_mosaic.version = 11 : i64} {
  func.func @kernel(%arg0: i32, %arg1: memref<16x128xf32, #tpu.memory_space<vmem>>, %arg2: memref<128x128xf32, #tpu.memory_space<vmem>>, %arg3: memref<1x128xf32, #tpu.memory_space<vmem>>, %arg4: memref<128x128xf32, #tpu.memory_space<vmem>>, %arg5: memref<1x128xf32, #tpu.memory_space<vmem>>, %arg6: memref<16x128xf32, #tpu.memory_space<vmem>>, %arg7: memref<16x128xf32, #tpu.memory_space<vmem>>) attributes {dimension_semantics = [#tpu.dimension_semantics<parallel>], iteration_bounds = array<i64: 1>, scalar_prefetch = 0 : i64, scratch_operands = 1 : i64, tpu.core_type = #tpu.core_type<tc>, window_params = [{transform_indices = @transform_0, window_bounds = array<i64: 16, 128>}, {pipeline_mode = #tpu.pipeline_mode<synchronous>, transform_indices = @transform_1, window_bounds = array<i64: 128, 128>}, {pipeline_mode = #tpu.pipeline_mode<synchronous>, transform_indices = @transform_2, window_bounds = array<i64: 1, 128>}, {pipeline_mode = #tpu.pipeline_mode<synchronous>, transform_indices = @transform_3, window_bounds = array<i64: 128, 128>}, {pipeline_mode = #tpu.pipeline_mode<synchronous>, transform_indices = @transform_4, window_bounds = array<i64: 1, 128>}, {transform_indices = @transform_5, window_bounds = array<i64: 16, 128>}]} {
    %c0 = arith.constant 0 : index
    %c0_0 = arith.constant 0 : index
    %0 = vector.load %arg1[%c0, %c0_0] : memref<16x128xf32, #tpu.memory_space<vmem>>, vector<16x128xf32>
    %c0_1 = arith.constant 0 : index
    %c0_2 = arith.constant 0 : index
    %1 = vector.load %arg2[%c0_1, %c0_2] : memref<128x128xf32, #tpu.memory_space<vmem>>, vector<128x128xf32>
    %cst = arith.constant dense<0.000000e+00> : vector<16x128xf32>
    %2 = tpu.matmul %0, %1, %cst {dimension_numbers = #tpu.dot_dimension_numbers<[1], [0], [0], [1], [0, 0, 1, 1], [], []>} : vector<16x128xf32>, vector<128x128xf32>, vector<16x128xf32> -> vector<16x128xf32>
    %c0_3 = arith.constant 0 : index
    %c0_4 = arith.constant 0 : index
    %3 = vector.load %arg3[%c0_3, %c0_4] : memref<1x128xf32, #tpu.memory_space<vmem>>, vector<1x128xf32>
    %4 = vector.broadcast %3 : vector<1x128xf32> to vector<16x128xf32>
    %5 = arith.addf %2, %4 : vector<16x128xf32>
    %cst_5 = arith.constant 0.000000e+00 : f32
    %6 = vector.broadcast %cst_5 : f32 to vector<16x128xf32>
    %7 = arith.maximumf %5, %6 : vector<16x128xf32>
    %c0_6 = arith.constant 0 : index
    %c0_7 = arith.constant 0 : index
    %8 = vector.load %arg4[%c0_6, %c0_7] : memref<128x128xf32, #tpu.memory_space<vmem>>, vector<128x128xf32>
    %cst_8 = arith.constant dense<0.000000e+00> : vector<16x128xf32>
    %9 = tpu.matmul %7, %8, %cst_8 {dimension_numbers = #tpu.dot_dimension_numbers<[1], [0], [0], [1], [0, 0, 1, 1], [], []>} : vector<16x128xf32>, vector<128x128xf32>, vector<16x128xf32> -> vector<16x128xf32>
    %c0_9 = arith.constant 0 : index
    %c0_10 = arith.constant 0 : index
    %10 = vector.load %arg7[%c0_9, %c0_10] : memref<16x128xf32, #tpu.memory_space<vmem>>, vector<16x128xf32>
    tpu.vector_store %arg7[%c0_9, %c0_10], %9 {strides = array<i32>} : memref<16x128xf32, #tpu.memory_space<vmem>>, vector<16x128xf32>,
    %c0_11 = arith.constant 0 : index
    %c0_12 = arith.constant 0 : index
    %11 = vector.load %arg7[%c0_11, %c0_12] : memref<16x128xf32, #tpu.memory_space<vmem>>, vector<16x128xf32>
    %c0_13 = arith.constant 0 : index
    %c0_14 = arith.constant 0 : index
    %12 = vector.load %arg5[%c0_13, %c0_14] : memref<1x128xf32, #tpu.memory_space<vmem>>, vector<1x128xf32>
    %13 = vector.broadcast %12 : vector<1x128xf32> to vector<16x128xf32>
    %14 = arith.addf %11, %13 : vector<16x128xf32>
    %c0_15 = arith.constant 0 : index
    %c0_16 = arith.constant 0 : index
    %15 = vector.load %arg6[%c0_15, %c0_16] : memref<16x128xf32, #tpu.memory_space<vmem>>, vector<16x128xf32>
    tpu.vector_store %arg6[%c0_15, %c0_16], %14 {strides = array<i32>} : memref<16x128xf32, #tpu.memory_space<vmem>>, vector<16x128xf32>,
    return
  }
  func.func @transform_0(%arg0: i32) -> (i32, i32) {
    %c0_i32 = arith.constant 0 : i32
    %c0_i32_0 = arith.constant 0 : i32
    return %arg0, %c0_i32 : i32, i32
  }
  func.func @transform_1(%arg0: i32) -> (i32, i32) {
    %c0_i32 = arith.constant 0 : i32
    %c0_i32_0 = arith.constant 0 : i32
    %c0_i32_1 = arith.constant 0 : i32
    return %c0_i32, %c0_i32_0 : i32, i32
  }
  func.func @transform_2(%arg0: i32) -> (i32, i32) {
    %c0_i32 = arith.constant 0 : i32
    %c0_i32_0 = arith.constant 0 : i32
    %c0_i32_1 = arith.constant 0 : i32
    return %c0_i32, %c0_i32_0 : i32, i32
  }
  func.func @transform_3(%arg0: i32) -> (i32, i32) {
    %c0_i32 = arith.constant 0 : i32
    %c0_i32_0 = arith.constant 0 : i32
    %c0_i32_1 = arith.constant 0 : i32
    return %c0_i32, %c0_i32_0 : i32, i32
  }
  func.func @transform_4(%arg0: i32) -> (i32, i32) {
    %c0_i32 = arith.constant 0 : i32
    %c0_i32_0 = arith.constant 0 : i32
    %c0_i32_1 = arith.constant 0 : i32
    return %c0_i32, %c0_i32_0 : i32, i32
  }
  func.func @transform_5(%arg0: i32) -> (i32, i32) {
    %c0_i32 = arith.constant 0 : i32
    %c0_i32_0 = arith.constant 0 : i32
    return %arg0, %c0_i32 : i32, i32
  }
}

</mosaic_0001>

<llo_original>
// kernel: tpu_custom_call.1
$region0: #{tpu_custom_call.1}
  #allocation0 [shape = 'u32[]', space=smem, size = 0x4, offset = 0x4, fixed_abs, tag = 'smem constant byte address 0x4 - core index']
  #allocation1 [shape = 'u32[144,128]{1,0:T(1,128)}', space=vmem, size = 0x12000, scoped, tag = 'internal scratch']
  #allocation2 [shape = 'f32[16,128]{1,0:T(8,128)}', space=vmem, size = 0x2000, scoped, tag = 'scratch operand']
  %s0 = inlined_call_operand.hbm [shape: f32[16,128], index: 0, kind: input, shape index: {}]
  %s1 = inlined_call_operand.hbm [shape: f32[128,128], index: 1, kind: input, shape index: {}]
  %s2 = inlined_call_operand.vmem [shape: f32[1,128], index: 2, kind: input, shape index: {}]
  %s3 = inlined_call_operand.hbm [shape: f32[128,128], index: 3, kind: input, shape index: {}]
  %s4 = inlined_call_operand.vmem [shape: f32[1,128], index: 4, kind: input, shape index: {}]
  %s5 = inlined_call_operand.hbm [shape: f32[16,128], index: 5, kind: output, shape index: {}]
  %s6 = sld [smem:[#allocation0]]
  $region42: #{tpu_custom_call.1} parent=0
    _
  %s8 = ssub.s32 1, %s6
  %s9 = scalar_select 0, %s8, %s6
  $region1: #{tpu_custom_call.1} parent=0
    #allocation3 [shape = 'u8[8192]{0}', space=vmem, size = 0x2000, scoped, tag = 'input window, operand 0, single buffered']
    #allocation4 [shape = 's32[1]{0}', space=sflag, size = 0x4, scoped, tag = 'scoped memory for tpu_custom_call.1']
    #allocation5 [shape = 's32[1]{0}', space=sflag, size = 0x4, scoped, tag = 'scoped memory for tpu_custom_call.1']
    #allocation6 [shape = 'u8[65536]{0}', space=vmem, size = 0x10000, scoped, tag = 'input window, operand 1, single buffered']
    #allocation7 [shape = 's32[1]{0}', space=sflag, size = 0x4, scoped, tag = 'scoped memory for tpu_custom_call.1']
    #allocation8 [shape = 'u8[65536]{0}', space=vmem, size = 0x10000, scoped, tag = 'input window, operand 3, single buffered']
    #allocation9 [shape = 'u8[8192]{0}', space=vmem, size = 0x2000, scoped, tag = 'output window, operand 0, single buffered']
    %10 = vsyncpa [#allocation4], 0
    %11 = vsyncpa [#allocation7], 0
    %12 = vsyncpa [#allocation5], 0
    // Predicated region
    $region2: #{tpu_custom_call.1} parent=1 // pred_check
      _
    $region3: #{tpu_custom_call.1} parent=1 // pred_check_branch
      %14 = sbr.rel (0) target = $region5
    $region4: #{tpu_custom_call.1} parent=1 // pred_region
      %s16 = ssub.s32 256, 256
      %17 = vsyncadd [#allocation4], %s16
      %s18 = sshll.u32 [#allocation3], 4
      %s19 = int_to_ptr.vmem [resolvable:$true] %s18
      %24 = dma.hbm_to_vmem [thread:$0]  %s0, 256, %s19, [#allocation4], 128, 128, 8
    $region5: #{tpu_custom_call.1} parent=1 // pred_fallthru
      _
    // Predicated region
    $region6: #{tpu_custom_call.1} parent=1 // pred_check
      _
    $region7: #{tpu_custom_call.1} parent=1 // pred_check_branch
      %26 = sbr.rel (0) target = $region9
    $region8: #{tpu_custom_call.1} parent=1 // pred_region
      %s28 = ssub.s32 2048, 2048
      %29 = vsyncadd [#allocation7], %s28
      %s30 = sshll.u32 [#allocation6], 4
      %s31 = int_to_ptr.vmem [resolvable:$true] %s30
      %36 = dma.hbm_to_vmem [thread:$0]  %s1, 2048, %s31, [#allocation7], 128, 128, 8
    $region9: #{tpu_custom_call.1} parent=1 // pred_fallthru
      _
    // Predicated region
    $region10: #{tpu_custom_call.1} parent=1 // pred_check
      _
    $region11: #{tpu_custom_call.1} parent=1 // pred_check_branch
      %38 = sbr.rel (0) target = $region13
    $region12: #{tpu_custom_call.1} parent=1 // pred_region
      _
    $region13: #{tpu_custom_call.1} parent=1 // pred_fallthru
      _
    // Predicated region
    $region14: #{tpu_custom_call.1} parent=1 // pred_check
      _
    $region15: #{tpu_custom_call.1} parent=1 // pred_check_branch
      %40 = sbr.rel (0) target = $region17
    $region16: #{tpu_custom_call.1} parent=1 // pred_region
      %s42 = ssub.s32 2048, 2048
      %43 = vsyncadd [#allocation7], %s42
      %s44 = sshll.u32 [#allocation8], 4
      %s45 = int_to_ptr.vmem [resolvable:$true] %s44
      %50 = dma.hbm_to_vmem [thread:$0]  %s3, 2048, %s45, [#allocation7], 128, 128, 8
    $region17: #{tpu_custom_call.1} parent=1 // pred_fallthru
      _
    // Predicated region
    $region18: #{tpu_custom_call.1} parent=1 // pred_check
      _
    $region19: #{tpu_custom_call.1} parent=1 // pred_check_branch
      %52 = sbr.rel (0) target = $region21
    $region20: #{tpu_custom_call.1} parent=1 // pred_region
      _
    $region21: #{tpu_custom_call.1} parent=1 // pred_fallthru
      _
    // Predicated region
    $region22: #{tpu_custom_call.1} parent=1 // pred_check
      _
    $region23: #{tpu_custom_call.1} parent=1 // pred_check_branch
      %54 = sbr.rel (0) target = $region25
    $region24: #{tpu_custom_call.1} parent=1 // pred_region
      %55 = dma.done [#allocation4], 256
    $region25: #{tpu_custom_call.1} parent=1 // pred_fallthru
      _
    // Predicated region
    $region26: #{tpu_custom_call.1} parent=1 // pred_check
      _
    $region27: #{tpu_custom_call.1} parent=1 // pred_check_branch
      %57 = sbr.rel (0) target = $region29
    $region28: #{tpu_custom_call.1} parent=1 // pred_region
      %58 = dma.done [#allocation7], 2048
    $region29: #{tpu_custom_call.1} parent=1 // pred_fallthru
      _
    // Predicated region
    $region30: #{tpu_custom_call.1} parent=1 // pred_check
      _
    $region31: #{tpu_custom_call.1} parent=1 // pred_check_branch
      %60 = sbr.rel (0) target = $region33
    $region32: #{tpu_custom_call.1} parent=1 // pred_region
      %61 = dma.done [#allocation7], 2048
    $region33: #{tpu_custom_call.1} parent=1 // pred_fallthru
      _
    %v62 = vld [vmem:[#allocation3] sm:$0xff]
    %v63 = vld [vmem:[#allocation3 + $0x8] sm:$0xff]
    %v64 = vld [vmem:[#allocation6] sm:$0xff]
    %v65 = vld [vmem:[#allocation6 + $0x8] sm:$0xff]
    %v66 = vld [vmem:[#allocation6 + $0x10] sm:$0xff]
    %v67 = vld [vmem:[#allocation6 + $0x18] sm:$0xff]
    %v68 = vld [vmem:[#allocation6 + $0x20] sm:$0xff]
    %v69 = vld [vmem:[#allocation6 + $0x28] sm:$0xff]
    %v70 = vld [vmem:[#allocation6 + $0x30] sm:$0xff]
    %v71 = vld [vmem:[#allocation6 + $0x38] sm:$0xff]
    %v72 = vld [vmem:[#allocation6 + $0x40] sm:$0xff]
    %v73 = vld [vmem:[#allocation6 + $0x48] sm:$0xff]
    %v74 = vld [vmem:[#allocation6 + $0x50] sm:$0xff]
    %v75 = vld [vmem:[#allocation6 + $0x58] sm:$0xff]
    %v76 = vld [vmem:[#allocation6 + $0x60] sm:$0xff]
    %v77 = vld [vmem:[#allocation6 + $0x68] sm:$0xff]
    %v78 = vld [vmem:[#allocation6 + $0x70] sm:$0xff]
    %v79 = vld [vmem:[#allocation6 + $0x78] sm:$0xff]
    %v80 = vld [vmem:[%s2] sm:$0x1]
    %v82 = vlaneseq
    %v83 = vshrl.u32 %v82, 7
    %v84 = vsub.s32 0, %v83
    %v85 = vrot.slane %v80, %v84
    %87 = vmatprep.subr.mxu0 0.0
    %88 = vmatpush1.msra.mxu0 %v79
    %89 = vmatprep.subr.mxu0 0.0
    %90 = vmatpush1.msra.mxu0 %v78
    %91 = vmatprep.subr.mxu0 0.0
    %92 = vmatpush1.msra.mxu0 %v77
    %93 = vmatprep.subr.mxu0 0.0
    %94 = vmatpush1.msra.mxu0 %v76
    %95 = vmatprep.subr.mxu0 0.0
    %96 = vmatpush1.msra.mxu0 %v75
    %97 = vmatprep.subr.mxu0 0.0
    %98 = vmatpush1.msra.mxu0 %v74
    %99 = vmatprep.subr.mxu0 0.0
    %100 = vmatpush1.msra.mxu0 %v73
    %101 = vmatprep.subr.mxu0 0.0
    %102 = vmatpush1.msra.mxu0 %v72
    %103 = vmatprep.subr.mxu0 0.0
    %104 = vmatpush1.msra.mxu0 %v71
    %105 = vmatprep.subr.mxu0 0.0
    %106 = vmatpush1.msra.mxu0 %v70
    %107 = vmatprep.subr.mxu0 0.0
    %108 = vmatpush1.msra.mxu0 %v69
    %109 = vmatprep.subr.mxu0 0.0
    %110 = vmatpush1.msra.mxu0 %v68
    %111 = vmatprep.subr.mxu0 0.0
    %112 = vmatpush1.msra.mxu0 %v67
    %113 = vmatprep.subr.mxu0 0.0
    %114 = vmatpush1.msra.mxu0 %v66
    %115 = vmatprep.subr.mxu0 0.0
    %116 = vmatpush1.msra.mxu0 %v65
    %117 = vmatprep.subr.mxu0 0.0
    %118 = vmatpush1.msra.mxu0 %v64
    %119 = vmatprep.subr.mxu0 0.0
    %120 = vmatpush2.msra.mxu0 0.0
    %121 = vmatprep.subr.mxu0 0.0
    %122 = vmatpush2.msra.mxu0 0.0
    %123 = vmatprep.subr.mxu0 0.0
    %124 = vmatpush2.msra.mxu0 0.0
    %125 = vmatprep.subr.mxu0 0.0
    %126 = vmatpush2.msra.mxu0 0.0
    %127 = vmatprep.subr.mxu0 0.0
    %128 = vmatpush2.msra.mxu0 0.0
    %129 = vmatprep.subr.mxu0 0.0
    %130 = vmatpush2.msra.mxu0 0.0
    %131 = vmatprep.subr.mxu0 0.0
    %132 = vmatpush2.msra.mxu0 0.0
    %133 = vmatprep.subr.mxu0 0.0
    %134 = vmatpush2.msra.mxu0 0.0
    %135 = vmatprep.subr.mxu0 0.0
    %136 = vmatpush2.msra.mxu0 0.0
    %137 = vmatprep.subr.mxu0 0.0
    %138 = vmatpush2.msra.mxu0 0.0
    %139 = vmatprep.subr.mxu0 0.0
    %140 = vmatpush2.msra.mxu0 0.0
    %141 = vmatprep.subr.mxu0 0.0
    %142 = vmatpush2.msra.mxu0 0.0
    %143 = vmatprep.subr.mxu0 0.0
    %144 = vmatpush2.msra.mxu0 0.0
    %145 = vmatprep.subr.mxu0 0.0
    %146 = vmatpush2.msra.mxu0 0.0
    %147 = vmatprep.subr.mxu0 0.0
    %148 = vmatpush2.msra.mxu0 0.0
    %149 = vmatprep.subr.mxu0 0.0
    %150 = vmatpush2.msra.mxu0 0.0
    %151 = vmatprep.mubr.f32.mxu0 0.0
    %152 = vmatmul.mubr.f32.gmra.mxu0 %v62
    %v153 = vpop.f32.mrf.mxu0
    %v154 = vadd.f32 %v85, %v153
    %v155 = vpop.f32.mrf.mxu0
    %156 = vmatprep.mubr.f32.mxu0 0.0
    %157 = vmatmul.mubr.f32.gmra.mxu0 %v63
    %v158 = vpop.f32.mrf.mxu0
    %v159 = vadd.f32 %v85, %v158
    %v160 = vpop.f32.mrf.mxu0
    %161 = vdwg.mxu0
    %v162 = vmax.f32 %v154, 0.0
    %v163 = vmax.f32 %v159, 0.0
    %v164 = vld [vmem:[#allocation8] sm:$0xff]
    %v165 = vld [vmem:[#allocation8 + $0x8] sm:$0xff]
    %v166 = vld [vmem:[#allocation8 + $0x10] sm:$0xff]
    %v167 = vld [vmem:[#allocation8 + $0x18] sm:$0xff]
    %v168 = vld [vmem:[#allocation8 + $0x20] sm:$0xff]
    %v169 = vld [vmem:[#allocation8 + $0x28] sm:$0xff]
    %v170 = vld [vmem:[#allocation8 + $0x30] sm:$0xff]
    %v171 = vld [vmem:[#allocation8 + $0x38] sm:$0xff]
    %v172 = vld [vmem:[#allocation8 + $0x40] sm:$0xff]
    %v173 = vld [vmem:[#allocation8 + $0x48] sm:$0xff]
    %v174 = vld [vmem:[#allocation8 + $0x50] sm:$0xff]
    %v175 = vld [vmem:[#allocation8 + $0x58] sm:$0xff]
    %v176 = vld [vmem:[#allocation8 + $0x60] sm:$0xff]
    %v177 = vld [vmem:[#allocation8 + $0x68] sm:$0xff]
    %v178 = vld [vmem:[#allocation8 + $0x70] sm:$0xff]
    %v179 = vld [vmem:[#allocation8 + $0x78] sm:$0xff]
    %180 = vmatprep.subr.mxu0 0.0
    %181 = vmatpush1.msra.mxu0 %v179
    %182 = vmatprep.subr.mxu0 0.0
    %183 = vmatpush1.msra.mxu0 %v178
    %184 = vmatprep.subr.mxu0 0.0
    %185 = vmatpush1.msra.mxu0 %v177
    %186 = vmatprep.subr.mxu0 0.0
    %187 = vmatpush1.msra.mxu0 %v176
    %188 = vmatprep.subr.mxu0 0.0
    %189 = vmatpush1.msra.mxu0 %v175
    %190 = vmatprep.subr.mxu0 0.0
    %191 = vmatpush1.msra.mxu0 %v174
    %192 = vmatprep.subr.mxu0 0.0
    %193 = vmatpush1.msra.mxu0 %v173
    %194 = vmatprep.subr.mxu0 0.0
    %195 = vmatpush1.msra.mxu0 %v172
    %196 = vmatprep.subr.mxu0 0.0
    %197 = vmatpush1.msra.mxu0 %v171
    %198 = vmatprep.subr.mxu0 0.0
    %199 = vmatpush1.msra.mxu0 %v170
    %200 = vmatprep.subr.mxu0 0.0
    %201 = vmatpush1.msra.mxu0 %v169
    %202 = vmatprep.subr.mxu0 0.0
    %203 = vmatpush1.msra.mxu0 %v168
    %204 = vmatprep.subr.mxu0 0.0
    %205 = vmatpush1.msra.mxu0 %v167
    %206 = vmatprep.subr.mxu0 0.0
    %207 = vmatpush1.msra.mxu0 %v166
    %208 = vmatprep.subr.mxu0 0.0
    %209 = vmatpush1.msra.mxu0 %v165
    %210 = vmatprep.subr.mxu0 0.0
    %211 = vmatpush1.msra.mxu0 %v164
    %212 = vmatprep.subr.mxu0 0.0
    %213 = vmatpush2.msra.mxu0 0.0
    %214 = vmatprep.subr.mxu0 0.0
    %215 = vmatpush2.msra.mxu0 0.0
    %216 = vmatprep.subr.mxu0 0.0
    %217 = vmatpush2.msra.mxu0 0.0
    %218 = vmatprep.subr.mxu0 0.0
    %219 = vmatpush2.msra.mxu0 0.0
    %220 = vmatprep.subr.mxu0 0.0
    %221 = vmatpush2.msra.mxu0 0.0
    %222 = vmatprep.subr.mxu0 0.0
    %223 = vmatpush2.msra.mxu0 0.0
    %224 = vmatprep.subr.mxu0 0.0
    %225 = vmatpush2.msra.mxu0 0.0
    %226 = vmatprep.subr.mxu0 0.0
    %227 = vmatpush2.msra.mxu0 0.0
    %228 = vmatprep.subr.mxu0 0.0
    %229 = vmatpush2.msra.mxu0 0.0
    %230 = vmatprep.subr.mxu0 0.0
    %231 = vmatpush2.msra.mxu0 0.0
    %232 = vmatprep.subr.mxu0 0.0
    %233 = vmatpush2.msra.mxu0 0.0
    %234 = vmatprep.subr.mxu0 0.0
    %235 = vmatpush2.msra.mxu0 0.0
    %236 = vmatprep.subr.mxu0 0.0
    %237 = vmatpush2.msra.mxu0 0.0
    %238 = vmatprep.subr.mxu0 0.0
    %239 = vmatpush2.msra.mxu0 0.0
    %240 = vmatprep.subr.mxu0 0.0
    %241 = vmatpush2.msra.mxu0 0.0
    %242 = vmatprep.subr.mxu0 0.0
    %243 = vmatpush2.msra.mxu0 0.0
    %244 = vmatprep.mubr.f32.mxu0 0.0
    %245 = vmatmul.mubr.f32.gmra.mxu0 %v162
    %v246 = vpop.f32.mrf.mxu0
    %v247 = vadd.f32 0.0, %v246
    %v248 = vpop.f32.mrf.mxu0
    %249 = vmatprep.mubr.f32.mxu0 0.0
    %250 = vmatmul.mubr.f32.gmra.mxu0 %v163
    %v251 = vpop.f32.mrf.mxu0
    %v252 = vadd.f32 0.0, %v251
    %v253 = vpop.f32.mrf.mxu0
    %254 = vdwg.mxu0
    %255 = vst [vmem:[#allocation2] sm:$0xff] %v247
    %256 = vst [vmem:[#allocation2 + $0x8] sm:$0xff] %v252
    %v257 = vld [vmem:[#allocation2] sm:$0xff]
    %v258 = vld [vmem:[#allocation2 + $0x8] sm:$0xff]
    %v259 = vld [vmem:[%s4] sm:$0x1]
    %v261 = vlaneseq
    %v262 = vshrl.u32 %v261, 7
    %v263 = vsub.s32 0, %v262
    %v264 = vrot.slane %v259, %v263
    %v266 = vadd.f32 %v257, %v264
    %v267 = vadd.f32 %v258, %v264
    %268 = vst [vmem:[#allocation9] sm:$0xff] %v266
    %269 = vst [vmem:[#allocation9 + $0x8] sm:$0xff] %v267
    // Predicated region
    $region34: #{tpu_custom_call.1} parent=1 // pred_check
      _
    $region35: #{tpu_custom_call.1} parent=1 // pred_check_branch
      %271 = sbr.rel (0) target = $region37
    $region36: #{tpu_custom_call.1} parent=1 // pred_region
      %s273 = ssub.s32 256, 256
      %274 = vsyncadd [#allocation5], %s273
      %s275 = sshll.u32 [#allocation9], 4
      %s276 = int_to_ptr.vmem [resolvable:$true] %s275
      %281 = dma.vmem_to_hbm [thread:$0]  %s276, 256, %s5, [#allocation5], 128, 128, 8
    $region37: #{tpu_custom_call.1} parent=1 // pred_fallthru
      _
    // Predicated region
    $region38: #{tpu_custom_call.1} parent=1 // pred_check
      _
    $region39: #{tpu_custom_call.1} parent=1 // pred_check_branch
      %283 = sbr.rel (0) target = $region41
    $region40: #{tpu_custom_call.1} parent=1 // pred_region
      %284 = dma.done [#allocation5], 256
    $region41: #{tpu_custom_call.1} parent=1 // pred_fallthru
      _
    %285 = vsyncpa [#allocation4], 1
    %286 = vsyncpa [#allocation7], 1
    %287 = vsyncpa [#allocation5], 1

</llo_original>
